<compile_context>
chip_gen: v7x
topology: tpu7x:2x2x1
jax: 0.10.0
libtpu: 0.0.40
codegen_flags: <defaults>
</compile_context>

<pallas_src>
import functools

import jax
import jax.numpy as jnp
from jax.experimental import pallas as pl
from jax.experimental.pallas import tpu as pltpu


# ----------------------------------------------------------------------------
# helpers
# ----------------------------------------------------------------------------
def _round_up(x, m):
    return ((x + m - 1) // m) * m


def _vmem_capacity_bytes():
    """Physical VMEM per TensorCore (generation-aware), with a safe fallback."""
    try:
        info = pltpu.get_tpu_info()
        cap = getattr(info, "vmem_capacity_bytes", None)
        if cap:
            return int(cap)
    except Exception:
        pass
    return 64 * 1024 * 1024  # conservative (v7x-sized) fallback


def _sanitize_tm(tm, np128):
    """Clamp tm so it is a multiple of 32 (int8 sublane tiling) and divides the
    128-aligned padded node count (either 32/64, or a multiple of 128)."""
    tm = min(tm, np128)
    if tm >= 128:
        return (tm // 128) * 128
    return 64 if tm >= 64 else 32


def _choose_block_rows(n, nfeat, hsum, nheads, vmem_cap):
    """Largest row tile whose working set fits ~55% of physical VMEM, modelling
    lane padding and the default 2x pipelining buffers (even for constant-index
    'resident' blocks)."""
    np128 = _round_up(n, 128)
    hsum_l = _round_up(hsum, 128)          # lane-padded width of Wh / out tiles
    nh_s = _round_up(nheads, 8)            # sublane-padded height of wh2t
    nf_l = _round_up(nfeat, 128)
    budget = int(vmem_cap * 0.55)

    # attention kernel
    res_att = 2 * (np128 * hsum_l * 2      # Wh (bf16, lane-padded), x2 buffers
                   + nh_s * np128 * 4)     # wh2t (f32), x2 buffers
    per_row_att = (2 * np128 * 1           # adj int8 tile, x2 buffers
                   + 2 * 128 * 4           # wh1 tile (lane-padded), x2 buffers
                   + 2 * hsum_l * 4        # out tile (lane-padded), x2 buffers
                   + 6 * np128 * 4)        # ~6 live f32 (TM, NP) temporaries
    tm_att = (budget - res_att) // per_row_att

    # projection kernel
    res_proj = 2 * (nf_l * hsum_l * 2 + 2 * max(hsum, 8) * 128 * 4)  # W bf16, A1/A2
    per_row_proj = (2 * nf_l * 2           # x tile (bf16), x2 buffers
                    + 2 * hsum_l * 2       # Wh out tile (bf16), x2 buffers
                    + 4 * 128 * 4          # wh1/wh2 out tiles, x2 buffers
                    + 2 * hsum_l * 4)      # f32 accumulator temporaries
    tm_proj = (budget - res_proj) // per_row_proj

    return int(max(32, min(1024, min(tm_att, tm_proj))))


# ----------------------------------------------------------------------------
# Kernel 1: row-tiled projection  Wh = x @ W_all,  wh1 = Wh @ A1,  wh2 = Wh @ A2
#   (A1/A2 are block-diagonal (hsum, nheads): each column is one head's a-vector.)
# ----------------------------------------------------------------------------
def gat_project_kernel(x_ref, w_ref, a1_ref, a2_ref, wh_ref, wh1_ref, wh2_ref):
    xb = x_ref[...].astype(jnp.bfloat16)                       # no-op if already bf16
    Wh = jnp.dot(xb, w_ref[...], preferred_element_type=jnp.float32)   # (TM, hsum) f32
    wh_ref[...] = Wh.astype(jnp.bfloat16)
    wh1_ref[...] = jnp.dot(Wh, a1_ref[...], preferred_element_type=jnp.float32)
    wh2_ref[...] = jnp.dot(Wh, a2_ref[...], preferred_element_type=jnp.float32)


# ----------------------------------------------------------------------------
# Kernel 2: row-tiled, head-fused attention
#   mode = 0 : hidden layer (concat=True)  -> ELU on the concatenated output (bf16)
#   mode = 1 : output layer (concat=False) -> ELU then log_softmax over classes (f32)
# ----------------------------------------------------------------------------
def gat_attention_kernel(wh1_ref, wh2t_ref, wh_ref, adj_ref, out_ref,
                         *, alpha, mode, nheads, nhid):
    adjf = adj_ref[...].astype(jnp.float32)      # (TM, NP) 0/1 mask, cast once per tile
    wh1 = wh1_ref[...]                           # (TM, nheads) f32
    wh2t = wh2t_ref[...]                         # (nheads, NP) f32

    heads = []
    for k in range(nheads):
        # e[p, j] = leakyrelu( a1·Wh[row p] + a2·Wh[j] )
        e = wh1[:, k:k + 1] + wh2t[k:k + 1, :]               # (TM, NP)
        e = jnp.where(e > 0, e, alpha * e)                   # LeakyReLU(alpha)
        m = jnp.max(e, axis=1, keepdims=True)                # unmasked row max (valid stabilizer)
        p = jnp.exp(e - m) * adjf                            # mask by multiply (no select)
        s = jnp.sum(p, axis=1, keepdims=True)
        s = s + (s == 0.0).astype(jnp.float32)               # guard fully-masked (padded) rows
        att = p * pl.reciprocal(s, approx=True)              # EUP approx recip (~1e-3 rel err)
        # h'_k = att @ Wh[:, head k]   (MXU, bf16 operands, f32 accumulate)
        hk = jnp.dot(att.astype(jnp.bfloat16),
                     wh_ref[:, k * nhid:(k + 1) * nhid],
                     preferred_element_type=jnp.float32)     # (TM, nhid) f32
        heads.append(hk)

    x = heads[0] if nheads == 1 else jnp.concatenate(heads, axis=1)   # (TM, hsum)
    x = jnp.where(x > 0, x, jnp.exp(jnp.minimum(x, 0.0)) - 1.0)       # ELU (f32)
    if mode == 1:
        xm = jnp.max(x, axis=1, keepdims=True)
        lse = jnp.log(jnp.sum(jnp.exp(x - xm), axis=1, keepdims=True)) + xm
        x = x - lse                                                   # log_softmax
    out_ref[...] = x.astype(out_ref.dtype)        # ONE lane-dense store per row tile


# ----------------------------------------------------------------------------
# One fused GAT layer (all heads) = tiled projection + tiled attention
# Inputs are already node-padded to n_pad (multiple of 128 and of tm).
# ----------------------------------------------------------------------------
def gat_layer_fused(x_p, W_all, A1, A2, adj_p, *, nheads, nhid, alpha, mode,
                    tm, vmem_limit):
    n_pad, nfeat = x_p.shape
    hsum = W_all.shape[1]
    assert hsum == nheads * nhid
    assert n_pad % tm == 0 and n_pad % 128 == 0
    grid = (n_pad // tm,)
    w_bf = W_all.astype(jnp.bfloat16)

    # ---- projection (row-tiled, MXU, bf16 operands / f32 accumulate) ----
    Wh, wh1, wh2 = pl.pallas_call(
        gat_project_kernel,
        out_shape=(
            jax.ShapeDtypeStruct((n_pad, hsum), jnp.bfloat16),
            jax.ShapeDtypeStruct((n_pad, nheads), jnp.float32),
            jax.ShapeDtypeStruct((n_pad, nheads), jnp.float32),
        ),
        grid=grid,
        in_specs=[
            pl.BlockSpec((tm, nfeat), lambda i: (i, 0)),       # x tile (streamed)
            pl.BlockSpec((nfeat, hsum), lambda i: (0, 0)),     # W (resident, bf16)
            pl.BlockSpec((hsum, nheads), lambda i: (0, 0)),    # A1 (resident)
            pl.BlockSpec((hsum, nheads), lambda i: (0, 0)),    # A2 (resident)
        ],
        out_specs=(
            pl.BlockSpec((tm, hsum), lambda i: (i, 0)),
            pl.BlockSpec((tm, nheads), lambda i: (i, 0)),
            pl.BlockSpec((tm, nheads), lambda i: (i, 0)),
        ),
        compiler_params=pltpu.CompilerParams(
            dimension_semantics=("parallel",), vmem_limit_bytes=vmem_limit),
    )(x_p, w_bf, A1, A2)

    # tiny (n_pad, nheads) transpose in XLA; the big Wh stays lane-dense as (N, hsum)
    wh2t = wh2.T

    out_dtype = jnp.bfloat16 if mode == 0 else jnp.float32
    kernel = functools.partial(gat_attention_kernel, alpha=alpha, mode=mode,
                               nheads=nheads, nhid=nhid)
    out = pl.pallas_call(
        kernel,
        out_shape=jax.ShapeDtypeStruct((n_pad, hsum), out_dtype),
        grid=grid,
        in_specs=[
            pl.BlockSpec((tm, nheads), lambda i: (i, 0)),      # wh1 tile (streamed)
            pl.BlockSpec((nheads, n_pad), lambda i: (0, 0)),   # wh2^T (resident)
            pl.BlockSpec((n_pad, hsum), lambda i: (0, 0)),     # Wh bf16, lane-dense (resident)
            pl.BlockSpec((tm, n_pad), lambda i: (i, 0)),       # adj tile (streamed, int8)
        ],
        out_specs=pl.BlockSpec((tm, hsum), lambda i: (i, 0)),
        compiler_params=pltpu.CompilerParams(
            dimension_semantics=("parallel",),                 # megacore on v7x
            vmem_limit_bytes=vmem_limit),
    )(wh1, wh2t, Wh, adj_p)
    return out


# ----------------------------------------------------------------------------
# Parameters (fused layout) and forward
# ----------------------------------------------------------------------------
def init_gat_params(key, nfeat, nhid, nclass, nheads):
    """Xavier-uniform-ish init matching pyGAT parameter shapes, stored fused."""
    def xavier(key, shape, gain=1.414):
        fan_in, fan_out = shape[0], shape[1]
        bound = gain * jnp.sqrt(6.0 / (fan_in + fan_out))
        return jax.random.uniform(key, shape, jnp.float32, -bound, bound)

    keys = jax.random.split(key, 2 * nheads + 2)
    Ws, a1s, a2s = [], [], []
    for i in range(nheads):
        W = xavier(keys[2 * i], (nfeat, nhid))
        a = xavier(keys[2 * i + 1], (2 * nhid, 1))
        Ws.append(W)
        a1s.append(a[:nhid, 0])
        a2s.append(a[nhid:, 0])

    hsum = nheads * nhid
    W_all = jnp.concatenate(Ws, axis=1)                      # (nfeat, nheads*nhid)
    A1 = jnp.zeros((hsum, nheads), jnp.float32)
    A2 = jnp.zeros((hsum, nheads), jnp.float32)
    for k in range(nheads):                                  # block-diagonal stacking
        A1 = A1.at[k * nhid:(k + 1) * nhid, k].set(a1s[k])
        A2 = A2.at[k * nhid:(k + 1) * nhid, k].set(a2s[k])

    W_out = xavier(keys[-2], (hsum, nclass))
    a_out = xavier(keys[-1], (2 * nclass, 1))
    return {
        "hidden": {"W_all": W_all, "A1": A1, "A2": A2, "nheads": nheads, "nhid": nhid},
        "out": {"W_all": W_out, "A1": a_out[:nclass], "A2": a_out[nclass:],
                "nheads": 1, "nhid": nclass},
    }


def gat_forward(params, x, adj, alpha, block_rows=None):
    # TODO(synk): dropout is a no-op here (module evaluated with training=False).
    N, nfeat = x.shape
    hid, outp = params["hidden"], params["out"]
    nheads, nhid = hid["nheads"], hid["nhid"]
    hsum = nheads * nhid

    vmem_cap = _vmem_capacity_bytes()
    vmem_limit = int(vmem_cap * 0.75)
    np128 = _round_up(N, 128)
    tm = block_rows if block_rows is not None else _choose_block_rows(
        N, max(nfeat, hsum), hsum, nheads, vmem_cap)
    tm = _sanitize_tm(tm, np128)
    n_pad = _round_up(np128, tm)           # multiple of both 128 and tm
    pad = n_pad - N

    # adj -> int8 0/1 mask, node dimension padded ONCE (rows & columns) and kept
    # padded across both layers.  Padded columns are killed by the multiply-mask;
    # padded rows hit the (sum==0) guard and produce exact zeros.
    adj_p = jnp.pad((adj > 0).astype(jnp.int8), ((0, pad), (0, pad)))
    x_p = jnp.pad(x, ((0, pad), (0, 0)))

    h = gat_layer_fused(x_p, hid["W_all"], hid["A1"], hid["A2"], adj_p,
                        nheads=nheads, nhid=nhid, alpha=alpha, mode=0,
                        tm=tm, vmem_limit=vmem_limit)          # (n_pad, hsum) bf16
    out = gat_layer_fused(h, outp["W_all"], outp["A1"], outp["A2"], adj_p,
                          nheads=1, nhid=outp["nhid"], alpha=alpha, mode=1,
                          tm=tm, vmem_limit=vmem_limit)        # (n_pad, nclass) f32
    return out[:N]


# ----------------------------------------------------------------------------
# Pure-JAX f32 reference (exact divide, f32 matmuls) for a correctness check
# ----------------------------------------------------------------------------
def gat_reference(params, x, adj, alpha):
    def layer(h, W_all, A1, A2, nheads, nhid, mode):
        Wh = h @ W_all
        wh1 = Wh @ A1
        wh2 = Wh @ A2
        outs = []
        for k in range(nheads):
            e = wh1[:, k:k + 1] + wh2[:, k:k + 1].T
            e = jnp.where(e > 0, e, alpha * e)
            att = jnp.where(adj > 0, e, jnp.float32(-9e15))
            att = jax.nn.softmax(att, axis=1)
            outs.append(att @ Wh[:, k * nhid:(k + 1) * nhid])
        hp = jnp.concatenate(outs, axis=1)
        out = jax.nn.elu(hp)
        return out if mode == 0 else jax.nn.log_softmax(out, axis=1)

    hid, outp = params["hidden"], params["out"]
    h = layer(x, hid["W_all"], hid["A1"], hid["A2"], hid["nheads"], hid["nhid"], 0)
    return layer(h, outp["W_all"], outp["A1"], outp["A2"], 1, outp["nhid"], 1)


if __name__ == "__main__":
    # Small deterministic example; N=72 is not a multiple of 128 (exercises padding)
    # and block_rows=64 gives a 2-step grid (n_pad=128).
    N, nfeat, nhid, nclass, nheads = 72, 32, 8, 4, 2
    alpha = 0.2

    key = jax.random.PRNGKey(0)
    k_x, k_adj, k_p = jax.random.split(key, 3)

    x = jax.random.normal(k_x, (N, nfeat), jnp.float32)
    # symmetric random adjacency with self-loops (self-loops keep softmax rows valid)
    a_rand = jax.random.uniform(k_adj, (N, N), jnp.float32)
    adj = ((a_rand + a_rand.T) * 0.5 > 0.6).astype(jnp.float32)
    adj = jnp.maximum(adj, jnp.eye(N, dtype=jnp.float32))

    params = init_gat_params(k_p, nfeat, nhid, nclass, nheads)

    out = gat_forward(params, x, adj, alpha, block_rows=64)
    jax.block_until_ready(out)
    assert out.shape == (N, nclass)

    ref = gat_reference(params, x, adj, alpha)
    err = float(jnp.max(jnp.abs(out - ref)))
    # loose tolerance vs the exact f32 reference: bf16 matmul operands (f32 accumulate)
    # plus pl.reciprocal(approx=True) dominate the difference.
    assert err < 1.5e-1, f"mismatch vs reference: max_abs_err={err}"
    print("KERNEL_OK")
</pallas_src>

<mosaic_0001>
module attributes {stable_mosaic.version = 11 : i64} {
  func.func @gat_project_kernel(%arg0: i32, %arg1: memref<64x32xf32, #tpu.memory_space<vmem>>, %arg2: memref<32x16xbf16, #tpu.memory_space<vmem>>, %arg3: memref<16x2xf32, #tpu.memory_space<vmem>>, %arg4: memref<16x2xf32, #tpu.memory_space<vmem>>, %arg5: memref<64x16xbf16, #tpu.memory_space<vmem>>, %arg6: memref<64x2xf32, #tpu.memory_space<vmem>>, %arg7: memref<64x2xf32, #tpu.memory_space<vmem>>) attributes {dimension_semantics = [#tpu.dimension_semantics<parallel>], iteration_bounds = array<i64: 2>, scalar_prefetch = 0 : i64, scratch_operands = 0 : i64, tpu.core_type = #tpu.core_type<tc>, window_params = [{transform_indices = @transform_0, window_bounds = array<i64: 64, 32>}, {pipeline_mode = #tpu.pipeline_mode<synchronous>, transform_indices = @transform_1, window_bounds = array<i64: 32, 16>}, {pipeline_mode = #tpu.pipeline_mode<synchronous>, transform_indices = @transform_2, window_bounds = array<i64: 16, 2>}, {pipeline_mode = #tpu.pipeline_mode<synchronous>, transform_indices = @transform_3, window_bounds = array<i64: 16, 2>}, {transform_indices = @transform_4, window_bounds = array<i64: 64, 16>}, {transform_indices = @transform_5, window_bounds = array<i64: 64, 2>}, {transform_indices = @transform_6, window_bounds = array<i64: 64, 2>}]} {
    %c0 = arith.constant 0 : index
    %c0_0 = arith.constant 0 : index
    %0 = vector.load %arg1[%c0, %c0_0] : memref<64x32xf32, #tpu.memory_space<vmem>>, vector<64x32xf32>
    %1 = arith.truncf %0 : vector<64x32xf32> to vector<64x32xbf16>
    %c0_1 = arith.constant 0 : index
    %c0_2 = arith.constant 0 : index
    %2 = vector.load %arg2[%c0_1, %c0_2] : memref<32x16xbf16, #tpu.memory_space<vmem>>, vector<32x16xbf16>
    %cst = arith.constant dense<0.000000e+00> : vector<64x16xf32>
    %3 = tpu.matmul %1, %2, %cst {dimension_numbers = #tpu.dot_dimension_numbers<[1], [0], [0], [1], [0, 0, 1, 1], [], []>} : vector<64x32xbf16>, vector<32x16xbf16>, vector<64x16xf32> -> vector<64x16xf32>
    %4 = arith.truncf %3 : vector<64x16xf32> to vector<64x16xbf16>
    %c0_3 = arith.constant 0 : index
    %c0_4 = arith.constant 0 : index
    %5 = vector.load %arg5[%c0_3, %c0_4] : memref<64x16xbf16, #tpu.memory_space<vmem>>, vector<64x16xbf16>
    tpu.vector_store %arg5[%c0_3, %c0_4], %4 {strides = array<i32>} : memref<64x16xbf16, #tpu.memory_space<vmem>>, vector<64x16xbf16>,
    %c0_5 = arith.constant 0 : index
    %c0_6 = arith.constant 0 : index
    %6 = vector.load %arg3[%c0_5, %c0_6] : memref<16x2xf32, #tpu.memory_space<vmem>>, vector<16x2xf32>
    %cst_7 = arith.constant dense<0.000000e+00> : vector<64x2xf32>
    %7 = tpu.matmul %3, %6, %cst_7 {dimension_numbers = #tpu.dot_dimension_numbers<[1], [0], [0], [1], [0, 0, 1, 1], [], []>} : vector<64x16xf32>, vector<16x2xf32>, vector<64x2xf32> -> vector<64x2xf32>
    %c0_8 = arith.constant 0 : index
    %c0_9 = arith.constant 0 : index
    %8 = vector.load %arg6[%c0_8, %c0_9] : memref<64x2xf32, #tpu.memory_space<vmem>>, vector<64x2xf32>
    tpu.vector_store %arg6[%c0_8, %c0_9], %7 {strides = array<i32>} : memref<64x2xf32, #tpu.memory_space<vmem>>, vector<64x2xf32>,
    %c0_10 = arith.constant 0 : index
    %c0_11 = arith.constant 0 : index
    %9 = vector.load %arg4[%c0_10, %c0_11] : memref<16x2xf32, #tpu.memory_space<vmem>>, vector<16x2xf32>
    %cst_12 = arith.constant dense<0.000000e+00> : vector<64x2xf32>
    %10 = tpu.matmul %3, %9, %cst_12 {dimension_numbers = #tpu.dot_dimension_numbers<[1], [0], [0], [1], [0, 0, 1, 1], [], []>} : vector<64x16xf32>, vector<16x2xf32>, vector<64x2xf32> -> vector<64x2xf32>
    %c0_13 = arith.constant 0 : index
    %c0_14 = arith.constant 0 : index
    %11 = vector.load %arg7[%c0_13, %c0_14] : memref<64x2xf32, #tpu.memory_space<vmem>>, vector<64x2xf32>
    tpu.vector_store %arg7[%c0_13, %c0_14], %10 {strides = array<i32>} : memref<64x2xf32, #tpu.memory_space<vmem>>, vector<64x2xf32>,
    return
  }
  func.func @transform_0(%arg0: i32) -> (i32, i32) {
    %c0_i32 = arith.constant 0 : i32
    %c0_i32_0 = arith.constant 0 : i32
    return %arg0, %c0_i32 : i32, i32
  }
  func.func @transform_1(%arg0: i32) -> (i32, i32) {
    %c0_i32 = arith.constant 0 : i32
    %c0_i32_0 = arith.constant 0 : i32
    %c0_i32_1 = arith.constant 0 : i32
    return %c0_i32, %c0_i32_0 : i32, i32
  }
  func.func @transform_2(%arg0: i32) -> (i32, i32) {
    %c0_i32 = arith.constant 0 : i32
    %c0_i32_0 = arith.constant 0 : i32
    %c0_i32_1 = arith.constant 0 : i32
    return %c0_i32, %c0_i32_0 : i32, i32
  }
  func.func @transform_3(%arg0: i32) -> (i32, i32) {
    %c0_i32 = arith.constant 0 : i32
    %c0_i32_0 = arith.constant 0 : i32
    %c0_i32_1 = arith.constant 0 : i32
    return %c0_i32, %c0_i32_0 : i32, i32
  }
  func.func @transform_4(%arg0: i32) -> (i32, i32) {
    %c0_i32 = arith.constant 0 : i32
    %c0_i32_0 = arith.constant 0 : i32
    return %arg0, %c0_i32 : i32, i32
  }
  func.func @transform_5(%arg0: i32) -> (i32, i32) {
    %c0_i32 = arith.constant 0 : i32
    %c0_i32_0 = arith.constant 0 : i32
    return %arg0, %c0_i32 : i32, i32
  }
  func.func @transform_6(%arg0: i32) -> (i32, i32) {
    %c0_i32 = arith.constant 0 : i32
    %c0_i32_0 = arith.constant 0 : i32
    return %arg0, %c0_i32 : i32, i32
  }
}

</mosaic_0001>

<llo_original>
// kernel: tpu_custom_call.1
$region0: #{tpu_custom_call.1}
  #allocation0 [shape = 'u32[]', space=smem, size = 0x4, offset = 0x4, fixed_abs, tag = 'smem constant byte address 0x4 - core index']
  #allocation1 [shape = 'u32[144,128]{1,0:T(1,128)}', space=vmem, size = 0x12000, scoped, tag = 'internal scratch']
  %s0 = inlined_call_operand.vmem [shape: f32[128,32], index: 0, kind: input, shape index: {}]
  %s1 = inlined_call_operand.vmem [shape: bf16[32,16], index: 1, kind: input, shape index: {}]
  %s2 = inlined_call_operand.vmem [shape: f32[16,2], index: 2, kind: input, shape index: {}]
  %s3 = inlined_call_operand.vmem [shape: f32[16,2], index: 3, kind: input, shape index: {}]
  %s4 = inlined_call_operand.vmem [shape: bf16[128,16], index: 4, kind: output, shape index: {0}]
  %s5 = inlined_call_operand.vmem [shape: f32[128,2], index: 5, kind: output, shape index: {1}]
  %s6 = inlined_call_operand.vmem [shape: f32[128,2], index: 6, kind: output, shape index: {2}]
  %7 = xla_tuple %s4, %s5, %s6
  %s8 = sld [smem:[#allocation0]]
  $region65: #{tpu_custom_call.1} parent=0
    _
  %s10 = ssub.s32 1, %s8
  %s11 = scalar_select 0, %s10, %s8
  loop: start=0, step=1, limit=4
  $region2: #{tpu_custom_call.1} parent=0 // loop_pre_header
    _
  $region3: #{tpu_custom_call.1} parent=0 // loop_header
    %s13 = sphi 0, %s17
    %p14 = scmp.ge.s32.totalorder %s13, 4
    %s23 = sphi 0, %s25
    %s26 = sphi 0, %s23
    %s27 = sphi 0, %s26
    %s43 = sphi 0, %s27
    %s47 = sphi 0, %s47
    %s49 = sphi 0, %s47
    %s50 = sphi 0, %s49
    %s64 = sphi 0, %s50
    %s68 = sphi 0, %s68
    %s70 = sphi 0, %s68
    %s71 = sphi 0, %s70
    %s85 = sphi 0, %s71
    %s89 = sphi 0, %s89
    %s91 = sphi 0, %s89
    %s92 = sphi 0, %s91
    %s106 = sphi 0, %s92
    %s112 = sphi 0, %s114
    %s115 = sphi 0, %s112
    %s116 = sphi 0, %s115
    %s132 = sphi 0, %s116
    %s138 = sphi 0, %s140
    %s141 = sphi 0, %s138
    %s142 = sphi 0, %s141
    %s158 = sphi 0, %s142
    %s164 = sphi 0, %s166
    %s167 = sphi 0, %s164
    %s168 = sphi 0, %s167
    %s184 = sphi 0, %s168
  $region4: #{tpu_custom_call.1} parent=0 // loop_header_branch
    %16 = sbr.rel (%p14) target = $region8
  $region5: #{tpu_custom_call.1} parent=0 // loop_body
    %s18 = ssub.s32 %s13, 1
    %s19 = ssub.s32 %s13, 2
    %s20 = sadd.s32 %s13, 1
    %s21 = ssub.s32 %s13, %s20
    %p22 = scmp.eq.s32.totalorder %s21, 0
    %s24 = sadd.s32 %s23, 1
    %s25 = scalar_select %p22, %s23, %s24
    %p28 = pneg %p22
    %p29 = scmp.eq.s32.totalorder %s13, 1
    %p30 = por %p28, %p29
    %p31 = scmp.ne.s32.totalorder %s23, %s26
    %p32 = scmp.eq.s32.totalorder %s13, 0
    %p33 = por %p31, %p32
    %p34 = scmp.ne.s32.totalorder %s23, %s26
    %p35 = scmp.eq.s32.totalorder %s18, 1
    %p36 = por %p34, %p35
    %p37 = scmp.ne.s32.totalorder %s26, %s27
    %p38 = scmp.eq.s32.totalorder %s18, 0
    %p39 = por %p37, %p38
    %p40 = scmp.ne.s32.totalorder %s26, %s27
    %p41 = scmp.eq.s32.totalorder %s19, 1
    %p42 = por %p40, %p41
    %p44 = scmp.ne.s32.totalorder %s27, %s43
    %p45 = scmp.eq.s32.totalorder %s19, 0
    %p46 = por %p44, %p45
    %s48 = sadd.s32 %s47, 1
    %p51 = scmp.eq.s32.totalorder %s13, 1
    %p52 = scmp.ne.s32.totalorder %s47, %s49
    %p53 = scmp.eq.s32.totalorder %s13, 0
    %p54 = por %p52, %p53
    %p55 = scmp.ne.s32.totalorder %s47, %s49
    %p56 = scmp.eq.s32.totalorder %s18, 1
    %p57 = por %p55, %p56
    %p58 = scmp.ne.s32.totalorder %s49, %s50
    %p59 = scmp.eq.s32.totalorder %s18, 0
    %p60 = por %p58, %p59
    %p61 = scmp.ne.s32.totalorder %s49, %s50
    %p62 = scmp.eq.s32.totalorder %s19, 1
    %p63 = por %p61, %p62
    %p65 = scmp.ne.s32.totalorder %s50, %s64
    %p66 = scmp.eq.s32.totalorder %s19, 0
    %p67 = por %p65, %p66
    %s69 = sadd.s32 %s68, 1
    %p72 = scmp.eq.s32.totalorder %s13, 1
    %p73 = scmp.ne.s32.totalorder %s68, %s70
    %p74 = scmp.eq.s32.totalorder %s13, 0
    %p75 = por %p73, %p74
    %p76 = scmp.ne.s32.totalorder %s68, %s70
    %p77 = scmp.eq.s32.totalorder %s18, 1
    %p78 = por %p76, %p77
    %p79 = scmp.ne.s32.totalorder %s70, %s71
    %p80 = scmp.eq.s32.totalorder %s18, 0
    %p81 = por %p79, %p80
    %p82 = scmp.ne.s32.totalorder %s70, %s71
    %p83 = scmp.eq.s32.totalorder %s19, 1
    %p84 = por %p82, %p83
    %p86 = scmp.ne.s32.totalorder %s71, %s85
    %p87 = scmp.eq.s32.totalorder %s19, 0
    %p88 = por %p86, %p87
    %s90 = sadd.s32 %s89, 1
    %p93 = scmp.eq.s32.totalorder %s13, 1
    %p94 = scmp.ne.s32.totalorder %s89, %s91
    %p95 = scmp.eq.s32.totalorder %s13, 0
    %p96 = por %p94, %p95
    %p97 = scmp.ne.s32.totalorder %s89, %s91
    %p98 = scmp.eq.s32.totalorder %s18, 1
    %p99 = por %p97, %p98
    %p100 = scmp.ne.s32.totalorder %s91, %s92
    %p101 = scmp.eq.s32.totalorder %s18, 0
    %p102 = por %p100, %p101
    %p103 = scmp.ne.s32.totalorder %s91, %s92
    %p104 = scmp.eq.s32.totalorder %s19, 1
    %p105 = por %p103, %p104
    %p107 = scmp.ne.s32.totalorder %s92, %s106
    %p108 = scmp.eq.s32.totalorder %s19, 0
    %p109 = por %p107, %p108
    %s110 = ssub.s32 %s13, %s20
    %p111 = scmp.eq.s32.totalorder %s110, 0
    %s113 = sadd.s32 %s112, 1
    %s114 = scalar_select %p111, %s112, %s113
    %p117 = pneg %p111
    %p118 = scmp.eq.s32.totalorder %s13, 1
    %p119 = por %p117, %p118
    %p120 = scmp.ne.s32.totalorder %s112, %s115
    %p121 = scmp.eq.s32.totalorder %s13, 0
    %p122 = por %p120, %p121
    %p123 = scmp.ne.s32.totalorder %s112, %s115
    %p124 = scmp.eq.s32.totalorder %s18, 1
    %p125 = por %p123, %p124
    %p126 = scmp.ne.s32.totalorder %s115, %s116
    %p127 = scmp.eq.s32.totalorder %s18, 0
    %p128 = por %p126, %p127
    %p129 = scmp.ne.s32.totalorder %s115, %s116
    %p130 = scmp.eq.s32.totalorder %s19, 1
    %p131 = por %p129, %p130
    %p133 = scmp.ne.s32.totalorder %s116, %s132
    %p134 = scmp.eq.s32.totalorder %s19, 0
    %p135 = por %p133, %p134
    %s136 = ssub.s32 %s13, %s20
    %p137 = scmp.eq.s32.totalorder %s136, 0
    %s139 = sadd.s32 %s138, 1
    %s140 = scalar_select %p137, %s138, %s139
    %p143 = pneg %p137
    %p144 = scmp.eq.s32.totalorder %s13, 1
    %p145 = por %p143, %p144
    %p146 = scmp.ne.s32.totalorder %s138, %s141
    %p147 = scmp.eq.s32.totalorder %s13, 0
    %p148 = por %p146, %p147
    %p149 = scmp.ne.s32.totalorder %s138, %s141
    %p150 = scmp.eq.s32.totalorder %s18, 1
    %p151 = por %p149, %p150
    %p152 = scmp.ne.s32.totalorder %s141, %s142
    %p153 = scmp.eq.s32.totalorder %s18, 0
    %p154 = por %p152, %p153
    %p155 = scmp.ne.s32.totalorder %s141, %s142
    %p156 = scmp.eq.s32.totalorder %s19, 1
    %p157 = por %p155, %p156
    %p159 = scmp.ne.s32.totalorder %s142, %s158
    %p160 = scmp.eq.s32.totalorder %s19, 0
    %p161 = por %p159, %p160
    %s162 = ssub.s32 %s13, %s20
    %p163 = scmp.eq.s32.totalorder %s162, 0
    %s165 = sadd.s32 %s164, 1
    %s166 = scalar_select %p163, %s164, %s165
    %p169 = pneg %p163
    %p170 = scmp.eq.s32.totalorder %s13, 1
    %p171 = por %p169, %p170
    %p172 = scmp.ne.s32.totalorder %s164, %s167
    %p173 = scmp.eq.s32.totalorder %s13, 0
    %p174 = por %p172, %p173
    %p175 = scmp.ne.s32.totalorder %s164, %s167
    %p176 = scmp.eq.s32.totalorder %s18, 1
    %p177 = por %p175, %p176
    %p178 = scmp.ne.s32.totalorder %s167, %s168
    %p179 = scmp.eq.s32.totalorder %s18, 0
    %p180 = por %p178, %p179
    %p181 = scmp.ne.s32.totalorder %s167, %s168
    %p182 = scmp.eq.s32.totalorder %s19, 1
    %p183 = por %p181, %p182
    %p185 = scmp.ne.s32.totalorder %s168, %s184
    %p186 = scmp.eq.s32.totalorder %s19, 0
    %p187 = por %p185, %p186
    %p188 = scmp.le.s32.totalorder 1, %s13
    %p189 = scmp.lt.s32.totalorder %s13, 3
    %p190 = pnand %p188, %p189
    %p191 = pneg %p190
    // Predicated region
    $region9: #{tpu_custom_call.1} parent=5 // pred_check
      _
    $region10: #{tpu_custom_call.1} parent=5 // pred_check_branch
      %193 = sbr.rel (%p190) target = $region12
    $region11: #{tpu_custom_call.1} parent=5 // pred_region
      %s194 = ssub.s32 %s13, 1
      // Predicated region
      $region13: #{tpu_custom_call.1} parent=11 // pred_check
        %p195 = pneg %p60
      $region14: #{tpu_custom_call.1} parent=11 // pred_check_branch
        %197 = sbr.rel (%p195) target = $region16
      $region15: #{tpu_custom_call.1} parent=11 // pred_region
        _
      $region16: #{tpu_custom_call.1} parent=11 // pred_fallthru
        _
      // Predicated region
      $region17: #{tpu_custom_call.1} parent=11 // pred_check
        %p198 = pneg %p81
      $region18: #{tpu_custom_call.1} parent=11 // pred_check_branch
        %200 = sbr.rel (%p198) target = $region20
      $region19: #{tpu_custom_call.1} parent=11 // pred_region
        _
      $region20: #{tpu_custom_call.1} parent=11 // pred_fallthru
        _
      // Predicated region
      $region21: #{tpu_custom_call.1} parent=11 // pred_check
        %p201 = pneg %p102
      $region22: #{tpu_custom_call.1} parent=11 // pred_check_branch
        %203 = sbr.rel (%p201) target = $region24
      $region23: #{tpu_custom_call.1} parent=11 // pred_region
        _
      $region24: #{tpu_custom_call.1} parent=11 // pred_fallthru
        _
    $region12: #{tpu_custom_call.1} parent=5 // pred_fallthru
      _
    %p204 = scmp.lt.s32.totalorder %s13, 2
    // Predicated region
    $region25: #{tpu_custom_call.1} parent=5 // pred_check
      %p205 = pneg %p204
    $region26: #{tpu_custom_call.1} parent=5 // pred_check_branch
      %207 = sbr.rel (%p205) target = $region28
    $region27: #{tpu_custom_call.1} parent=5 // pred_region
      // Predicated region
      $region29: #{tpu_custom_call.1} parent=27 // pred_check
        %p208 = pneg %p33
      $region30: #{tpu_custom_call.1} parent=27 // pred_check_branch
        %210 = sbr.rel (%p208) target = $region32
      $region31: #{tpu_custom_call.1} parent=27 // pred_region
        %s211 = smul.u32 8, %s13
        %p212 = scmp.lt.s32.totalorder %s211, 15
        %s213 = scalar_select %p212, %s211, 15
        %s214 = smul.addr %s213, 8
        %s215 = scalar_lea.vmem %s0, %s214
        %s216 = smul.u32 8, %s13
      $region32: #{tpu_custom_call.1} parent=27 // pred_fallthru
        _
    $region28: #{tpu_custom_call.1} parent=5 // pred_fallthru
      _
    %p217 = scmp.le.s32.totalorder 1, %s13
    %p218 = scmp.lt.s32.totalorder %s13, 3
    %p219 = pnand %p217, %p218
    %p220 = pneg %p219
    // Predicated region
    $region33: #{tpu_custom_call.1} parent=5 // pred_check
      _
    $region34: #{tpu_custom_call.1} parent=5 // pred_check_branch
      %222 = sbr.rel (%p219) target = $region36
    $region35: #{tpu_custom_call.1} parent=5 // pred_region
      %s223 = ssub.s32 %s13, 1
      %s224 = smul.u32 8, %s18
      %p225 = scmp.lt.s32.totalorder %s224, 15
      %s226 = scalar_select %p225, %s224, 15
      %s227 = smul.addr %s226, 8
      %s228 = scalar_lea.vmem %s0, %s227
      %p229 = pneg %p39
      %p230 = pneg %p36
      %p231 = pneg %p60
      %p232 = pneg %p57
      %p233 = pneg %p81
      %p234 = pneg %p78
      %p235 = pneg %p102
      %p236 = pneg %p99
      %p237 = pneg %p128
      %p238 = pneg %p125
      %s239 = smul.u32 8, %s18
      %p240 = scmp.lt.s32.totalorder %s239, 15
      %s241 = scalar_select %p240, %s239, 15
      %s242 = smul.addr %s241, 4
      %s243 = scalar_lea.vmem %s4, %s242
      %p244 = pneg %p154
      %p245 = pneg %p151
      %s246 = smul.u32 8, %s18
      %p247 = scmp.lt.s32.totalorder %s246, 15
      %s248 = scalar_select %p247, %s246, 15
      %s249 = smul.addr %s248, 8
      %s250 = scalar_lea.vmem %s5, %s249
      %p251 = pneg %p180
      %p252 = pneg %p177
      %s253 = smul.u32 8, %s18
      %p254 = scmp.lt.s32.totalorder %s253, 15
      %s255 = scalar_select %p254, %s253, 15
      %s256 = smul.addr %s255, 8
      %s257 = scalar_lea.vmem %s6, %s256
      %s258 = smul.u32 8, %s18
      %p259 = scmp.lt.s32.totalorder %s258, 15
      %s260 = scalar_select %p259, %s258, 15
      %s261 = smul.addr %s260, 8
      %s262 = scalar_lea.vmem %s0, %s261
      %s263 = smul.u32 8, %s18
      %s264 = smul.u32 8, %s18
      %p265 = scmp.lt.s32.totalorder %s264, 15
      %s266 = scalar_select %p265, %s264, 15
      %s267 = smul.addr %s266, 4
      %s268 = scalar_lea.vmem %s4, %s267
      %s269 = smul.u32 8, %s18
      %s270 = smul.u32 8, %s18
      %p271 = scmp.lt.s32.totalorder %s270, 15
      %s272 = scalar_select %p271, %s270, 15
      %s273 = smul.addr %s272, 8
      %s274 = scalar_lea.vmem %s5, %s273
      %s275 = smul.u32 8, %s18
      %s276 = smul.u32 8, %s18
      %p277 = scmp.lt.s32.totalorder %s276, 15
      %s278 = scalar_select %p277, %s276, 15
      %s279 = smul.addr %s278, 8
      %s280 = scalar_lea.vmem %s6, %s279
      %s281 = smul.u32 8, %s18
      %v283 = vld [vmem:[%s262] sm:$0xff]
      %v284 = vld [vmem:[%s262 + $0x8] sm:$0xff]
      %v285 = vld [vmem:[%s262 + $0x10] sm:$0xff]
      %v286 = vld [vmem:[%s262 + $0x18] sm:$0xff]
      %v287 = vld [vmem:[%s262 + $0x20] sm:$0xff]
      %v288 = vld [vmem:[%s262 + $0x28] sm:$0xff]
      %v289 = vld [vmem:[%s262 + $0x30] sm:$0xff]
      %v290 = vld [vmem:[%s262 + $0x38] sm:$0xff]
      %v291 = vpack.c.bf16 %v284, %v283
      %v292 = vpack.c.bf16 %v286, %v285
      %v293 = vpack.c.bf16 %v288, %v287
      %v294 = vpack.c.bf16 %v290, %v289
      %v295 = vld [vmem:[%s1] sm:$0xf]
      %v296 = vld [vmem:[%s1 + $0x4] sm:$0xf]
      %v297 = vld [vmem:[%s1 + $0x8] sm:$0xf]
      %v298 = vld [vmem:[%s1 + $0xc] sm:$0xf]
      %v303 = vunpack.c.l.b16 %v295
      %v304 = vunpack.c.l.b16 %v296
      %v305 = vunpack.c.l.b16 %v297
      %v306 = vunpack.c.l.b16 %v298
      %v307 = vpack.c.b16 %v304, %v303
      %v308 = vpack.c.b16 %v306, %v305
      %vm311 = vcmask 261120
      %v313 = vsel %vm311, %v291, 0
      %v316 = vsel %vm311, %v292, 0
      %v319 = vsel %vm311, %v293, 0
      %v322 = vsel %vm311, %v294, 0
      %324 = vmatprep.subr.bf16.mxu0 0
      %325 = vmatpush1.bf16.msra.mxu0 %v307
      %326 = vmatprep.subr.bf16.mxu0 0
      %327 = vmatpush1.bf16.msra.mxu0 %v308
      %328 = vmatprep.subr.bf16.mxu0 0
      %329 = vmatpush1.bf16.msra.mxu0 0
      %330 = vmatprep.subr.bf16.mxu0 0
      %331 = vmatpush1.bf16.msra.mxu0 0
      %332 = vmatprep.subr.bf16.mxu0 0
      %333 = vmatpush1.bf16.msra.mxu0 0
      %334 = vmatprep.subr.bf16.mxu0 0
      %335 = vmatpush1.bf16.msra.mxu0 0
      %336 = vmatprep.subr.bf16.mxu0 0
      %337 = vmatpush1.bf16.msra.mxu0 0
      %338 = vmatprep.subr.bf16.mxu0 0
      %339 = vmatpush1.bf16.msra.mxu0 0
      %340 = vmatprep.subr.bf16.mxu0 0
      %341 = vmatpush1.bf16.msra.mxu0 0
      %342 = vmatprep.subr.bf16.mxu0 0
      %343 = vmatpush1.bf16.msra.mxu0 0
      %344 = vmatprep.subr.bf16.mxu0 0
      %345 = vmatpush1.bf16.msra.mxu0 0
      %346 = vmatprep.subr.bf16.mxu0 0
      %347 = vmatpush1.bf16.msra.mxu0 0
      %348 = vmatprep.subr.bf16.mxu0 0
      %349 = vmatpush1.bf16.msra.mxu0 0
      %350 = vmatprep.subr.bf16.mxu0 0
      %351 = vmatpush1.bf16.msra.mxu0 0
      %352 = vmatprep.subr.bf16.mxu0 0
      %353 = vmatpush1.bf16.msra.mxu0 0
      %354 = vmatprep.subr.bf16.mxu0 0
      %355 = vmatpush1.bf16.msra.mxu0 0
      %356 = vmatprep.mubr.bf16.mxu0 0
      %357 = vmatmul.mubr.bf16.gmra.mrb[0].mxu0 %v313
      %v358 = vpop.f32.mrb[0].mxu0
      %v359 = vadd.f32 0.0, %v358
      %v360 = vpop.f32.mrb[0].mxu0
      %v361 = vpop.f32.mrb[0].mxu0
      %v362 = vadd.f32 0.0, %v361
      %v363 = vpop.f32.mrb[0].mxu0
      %364 = vmatprep.mubr.bf16.mxu0 0
      %365 = vmatmul.mubr.bf16.gmra.mrb[0].mxu0 %v316
      %v366 = vpop.f32.mrb[0].mxu0
      %v367 = vadd.f32 0.0, %v366
      %v368 = vpop.f32.mrb[0].mxu0
      %v369 = vpop.f32.mrb[0].mxu0
      %v370 = vadd.f32 0.0, %v369
      %v371 = vpop.f32.mrb[0].mxu0
      %372 = vmatprep.mubr.bf16.mxu0 0
      %373 = vmatmul.mubr.bf16.gmra.mrb[0].mxu0 %v319
      %v374 = vpop.f32.mrb[0].mxu0
      %v375 = vadd.f32 0.0, %v374
      %v376 = vpop.f32.mrb[0].mxu0
      %v377 = vpop.f32.mrb[0].mxu0
      %v378 = vadd.f32 0.0, %v377
      %v379 = vpop.f32.mrb[0].mxu0
      %380 = vmatprep.mubr.bf16.mxu0 0
      %381 = vmatmul.mubr.bf16.gmra.mrb[0].mxu0 %v322
      %v382 = vpop.f32.mrb[0].mxu0
      %v383 = vadd.f32 0.0, %v382
      %v384 = vpop.f32.mrb[0].mxu0
      %v385 = vpop.f32.mrb[0].mxu0
      %v386 = vadd.f32 0.0, %v385
      %v387 = vpop.f32.mrb[0].mxu0
      %388 = vdwg.mxu0
      %v389 = vpack.c.bf16 %v362, %v359
      %v390 = vpack.c.bf16 %v370, %v367
      %v391 = vpack.c.bf16 %v378, %v375
      %v392 = vpack.c.bf16 %v386, %v383
      %v397 = vunpack.c.l.b16 %v389
      %v398 = vunpack.c.h.b16 %v389
      %v399 = vunpack.c.l.b16 %v390
      %v400 = vunpack.c.h.b16 %v390
      %v401 = vunpack.c.l.b16 %v391
      %v402 = vunpack.c.h.b16 %v391
      %v403 = vunpack.c.l.b16 %v392
      %v404 = vunpack.c.h.b16 %v392
      %v405 = vpack.c.b16 %v397, %v397
      %v406 = vpack.c.b16 %v398, %v398
      %v407 = vpack.c.b16 %v399, %v399
      %v408 = vpack.c.b16 %v400, %v400
      %v409 = vpack.c.b16 %v401, %v401
      %v410 = vpack.c.b16 %v402, %v402
      %v411 = vpack.c.b16 %v403, %v403
      %v412 = vpack.c.b16 %v404, %v404
      %vm421 = vcmask 125952
      %422 = vst.msk [vmem:[%s268] sm:$0xf] %vm421, %v405
      %423 = vst.msk [vmem:[%s268 + $0x4] sm:$0xf] %vm421, %v406
      %424 = vst.msk [vmem:[%s268 + $0x8] sm:$0xf] %vm421, %v407
      %425 = vst.msk [vmem:[%s268 + $0xc] sm:$0xf] %vm421, %v408
      %426 = vst.msk [vmem:[%s268 + $0x10] sm:$0xf] %vm421, %v409
      %427 = vst.msk [vmem:[%s268 + $0x14] sm:$0xf] %vm421, %v410
      %428 = vst.msk [vmem:[%s268 + $0x18] sm:$0xf] %vm421, %v411
      %429 = vst.msk [vmem:[%s268 + $0x1c] sm:$0xf] %vm421, %v412
      %v430 = vld [vmem:[%s2] sm:$0xff]
      %v431 = vld [vmem:[%s2 + $0x8] sm:$0xff]
      %vm432 = vcmask 130048
      %v434 = vsel %vm432, %v359, 0
      %v437 = vsel %vm432, %v362, 0
      %v440 = vsel %vm432, %v367, 0
      %v443 = vsel %vm432, %v370, 0
      %v446 = vsel %vm432, %v375, 0
      %v449 = vsel %vm432, %v378, 0
      %v452 = vsel %vm432, %v383, 0
      %v455 = vsel %vm432, %v386, 0
      %457 = vmatprep.subr.mxu0 0.0
      %458 = vmatpush1.msra.mxu0 %v430
      %459 = vmatprep.subr.mxu0 0.0
      %460 = vmatpush1.msra.mxu0 %v431
      %461 = vmatprep.subr.mxu0 0.0
      %462 = vmatpush1.msra.mxu0 0.0
      %463 = vmatprep.subr.mxu0 0.0
      %464 = vmatpush1.msra.mxu0 0.0
      %465 = vmatprep.subr.mxu0 0.0
      %466 = vmatpush1.msra.mxu0 0.0
      %467 = vmatprep.subr.mxu0 0.0
      %468 = vmatpush1.msra.mxu0 0.0
      %469 = vmatprep.subr.mxu0 0.0
      %470 = vmatpush1.msra.mxu0 0.0
      %471 = vmatprep.subr.mxu0 0.0
      %472 = vmatpush1.msra.mxu0 0.0
      %473 = vmatprep.subr.mxu0 0.0
      %474 = vmatpush1.msra.mxu0 0.0
      %475 = vmatprep.subr.mxu0 0.0
      %476 = vmatpush1.msra.mxu0 0.0
      %477 = vmatprep.subr.mxu0 0.0
      %478 = vmatpush1.msra.mxu0 0.0
      %479 = vmatprep.subr.mxu0 0.0
      %480 = vmatpush1.msra.mxu0 0.0
      %481 = vmatprep.subr.mxu0 0.0
      %482 = vmatpush1.msra.mxu0 0.0
      %483 = vmatprep.subr.mxu0 0.0
      %484 = vmatpush1.msra.mxu0 0.0
      %485 = vmatprep.subr.mxu0 0.0
      %486 = vmatpush1.msra.mxu0 0.0
      %487 = vmatprep.subr.mxu0 0.0
      %488 = vmatpush1.msra.mxu0 0.0
      %489 = vmatprep.subr.mxu0 0.0
      %490 = vmatpush1.msra.mxu0 0.0
      %491 = vmatprep.subr.mxu0 0.0
      %492 = vmatpush1.msra.mxu0 0.0
      %493 = vmatprep.subr.mxu0 0.0
      %494 = vmatpush1.msra.mxu0 0.0
      %495 = vmatprep.subr.mxu0 0.0
      %496 = vmatpush1.msra.mxu0 0.0
      %497 = vmatprep.subr.mxu0 0.0
      %498 = vmatpush1.msra.mxu0 0.0
      %499 = vmatprep.subr.mxu0 0.0
      %500 = vmatpush1.msra.mxu0 0.0
      %501 = vmatprep.subr.mxu0 0.0
      %502 = vmatpush1.msra.mxu0 0.0
      %503 = vmatprep.subr.mxu0 0.0
      %504 = vmatpush1.msra.mxu0 0.0
      %505 = vmatprep.subr.mxu0 0.0
      %506 = vmatpush1.msra.mxu0 0.0
      %507 = vmatprep.subr.mxu0 0.0
      %508 = vmatpush1.msra.mxu0 0.0
      %509 = vmatprep.subr.mxu0 0.0
      %510 = vmatpush1.msra.mxu0 0.0
      %511 = vmatprep.subr.mxu0 0.0
      %512 = vmatpush1.msra.mxu0 0.0
      %513 = vmatprep.subr.mxu0 0.0
      %514 = vmatpush1.msra.mxu0 0.0
      %515 = vmatprep.subr.mxu0 0.0
      %516 = vmatpush1.msra.mxu0 0.0
      %517 = vmatprep.subr.mxu0 0.0
      %518 = vmatpush1.msra.mxu0 0.0
      %519 = vmatprep.subr.mxu0 0.0
      %520 = vmatpush1.msra.mxu0 0.0
      %521 = vmatprep.mubr.f32.mxu0 0.0
      %522 = vmatmul.mubr.f32.gmra.mrb[0].mxu0 %v434
      %v523 = vpop.f32.mrb[0].mxu0
      %v524 = vadd.f32 0.0, %v523
      %v525 = vpop.f32.mrb[0].mxu0
      %526 = vmatprep.mubr.f32.mxu0 0.0
      %527 = vmatmul.mubr.f32.gmra.mrb[0].mxu0 %v437
      %v528 = vpop.f32.mrb[0].mxu0
      %v529 = vadd.f32 0.0, %v528
      %v530 = vpop.f32.mrb[0].mxu0
      %531 = vmatprep.mubr.f32.mxu0 0.0
      %532 = vmatmul.mubr.f32.gmra.mrb[0].mxu0 %v440
      %v533 = vpop.f32.mrb[0].mxu0
      %v534 = vadd.f32 0.0, %v533
      %v535 = vpop.f32.mrb[0].mxu0
      %536 = vmatprep.mubr.f32.mxu0 0.0
      %537 = vmatmul.mubr.f32.gmra.mrb[0].mxu0 %v443
      %v538 = vpop.f32.mrb[0].mxu0
      %v539 = vadd.f32 0.0, %v538
      %v540 = vpop.f32.mrb[0].mxu0
      %541 = vmatprep.mubr.f32.mxu0 0.0
      %542 = vmatmul.mubr.f32.gmra.mrb[0].mxu0 %v446
      %v543 = vpop.f32.mrb[0].mxu0
      %v544 = vadd.f32 0.0, %v543
      %v545 = vpop.f32.mrb[0].mxu0
      %546 = vmatprep.mubr.f32.mxu0 0.0
      %547 = vmatmul.mubr.f32.gmra.mrb[0].mxu0 %v449
      %v548 = vpop.f32.mrb[0].mxu0
      %v549 = vadd.f32 0.0, %v548
      %v550 = vpop.f32.mrb[0].mxu0
      %551 = vmatprep.mubr.f32.mxu0 0.0
      %552 = vmatmul.mubr.f32.gmra.mrb[0].mxu0 %v452
      %v553 = vpop.f32.mrb[0].mxu0
      %v554 = vadd.f32 0.0, %v553
      %v555 = vpop.f32.mrb[0].mxu0
      %556 = vmatprep.mubr.f32.mxu0 0.0
      %557 = vmatmul.mubr.f32.gmra.mrb[0].mxu0 %v455
      %v558 = vpop.f32.mrb[0].mxu0
      %v559 = vadd.f32 0.0, %v558
      %v560 = vpop.f32.mrb[0].mxu0
      %561 = vdwg.mxu0
      %vm562 = vcmask 15360
      %563 = vst.msk [vmem:[%s274] sm:$0xff] %vm562, %v524
      %564 = vst.msk [vmem:[%s274 + $0x8] sm:$0xff] %vm562, %v529
      %565 = vst.msk [vmem:[%s274 + $0x10] sm:$0xff] %vm562, %v534
      %566 = vst.msk [vmem:[%s274 + $0x18] sm:$0xff] %vm562, %v539
      %567 = vst.msk [vmem:[%s274 + $0x20] sm:$0xff] %vm562, %v544
      %568 = vst.msk [vmem:[%s274 + $0x28] sm:$0xff] %vm562, %v549
      %569 = vst.msk [vmem:[%s274 + $0x30] sm:$0xff] %vm562, %v554
      %570 = vst.msk [vmem:[%s274 + $0x38] sm:$0xff] %vm562, %v559
      %v571 = vld [vmem:[%s3] sm:$0xff]
      %v572 = vld [vmem:[%s3 + $0x8] sm:$0xff]
      %573 = vmatprep.subr.mxu0 0.0
      %574 = vmatpush1.msra.mxu0 %v571
      %575 = vmatprep.subr.mxu0 0.0
      %576 = vmatpush1.msra.mxu0 %v572
      %577 = vmatprep.subr.mxu0 0.0
      %578 = vmatpush1.msra.mxu0 0.0
      %579 = vmatprep.subr.mxu0 0.0
      %580 = vmatpush1.msra.mxu0 0.0
      %581 = vmatprep.subr.mxu0 0.0
      %582 = vmatpush1.msra.mxu0 0.0
      %583 = vmatprep.subr.mxu0 0.0
      %584 = vmatpush1.msra.mxu0 0.0
      %585 = vmatprep.subr.mxu0 0.0
      %586 = vmatpush1.msra.mxu0 0.0
      %587 = vmatprep.subr.mxu0 0.0
      %588 = vmatpush1.msra.mxu0 0.0
      %589 = vmatprep.subr.mxu0 0.0
      %590 = vmatpush1.msra.mxu0 0.0
      %591 = vmatprep.subr.mxu0 0.0
      %592 = vmatpush1.msra.mxu0 0.0
      %593 = vmatprep.subr.mxu0 0.0
      %594 = vmatpush1.msra.mxu0 0.0
      %595 = vmatprep.subr.mxu0 0.0
      %596 = vmatpush1.msra.mxu0 0.0
      %597 = vmatprep.subr.mxu0 0.0
      %598 = vmatpush1.msra.mxu0 0.0
      %599 = vmatprep.subr.mxu0 0.0
      %600 = vmatpush1.msra.mxu0 0.0
      %601 = vmatprep.subr.mxu0 0.0
      %602 = vmatpush1.msra.mxu0 0.0
      %603 = vmatprep.subr.mxu0 0.0
      %604 = vmatpush1.msra.mxu0 0.0
      %605 = vmatprep.subr.mxu0 0.0
      %606 = vmatpush1.msra.mxu0 0.0
      %607 = vmatprep.subr.mxu0 0.0
      %608 = vmatpush1.msra.mxu0 0.0
      %609 = vmatprep.subr.mxu0 0.0
      %610 = vmatpush1.msra.mxu0 0.0
      %611 = vmatprep.subr.mxu0 0.0
      %612 = vmatpush1.msra.mxu0 0.0
      %613 = vmatprep.subr.mxu0 0.0
      %614 = vmatpush1.msra.mxu0 0.0
      %615 = vmatprep.subr.mxu0 0.0
      %616 = vmatpush1.msra.mxu0 0.0
      %617 = vmatprep.subr.mxu0 0.0
      %618 = vmatpush1.msra.mxu0 0.0
      %619 = vmatprep.subr.mxu0 0.0
      %620 = vmatpush1.msra.mxu0 0.0
      %621 = vmatprep.subr.mxu0 0.0
      %622 = vmatpush1.msra.mxu0 0.0
      %623 = vmatprep.subr.mxu0 0.0
      %624 = vmatpush1.msra.mxu0 0.0
      %625 = vmatprep.subr.mxu0 0.0
      %626 = vmatpush1.msra.mxu0 0.0
      %627 = vmatprep.subr.mxu0 0.0
      %628 = vmatpush1.msra.mxu0 0.0
      %629 = vmatprep.subr.mxu0 0.0
      %630 = vmatpush1.msra.mxu0 0.0
      %631 = vmatprep.subr.mxu0 0.0
      %632 = vmatpush1.msra.mxu0 0.0
      %633 = vmatprep.subr.mxu0 0.0
      %634 = vmatpush1.msra.mxu0 0.0
      %635 = vmatprep.subr.mxu0 0.0
      %636 = vmatpush1.msra.mxu0 0.0
      %637 = vmatprep.mubr.f32.mxu0 0.0
      %638 = vmatmul.mubr.f32.gmra.mrb[0].mxu0 %v434
      %v639 = vpop.f32.mrb[0].mxu0
      %v640 = vadd.f32 0.0, %v639
      %v641 = vpop.f32.mrb[0].mxu0
      %642 = vmatprep.mubr.f32.mxu0 0.0
      %643 = vmatmul.mubr.f32.gmra.mrb[0].mxu0 %v437
      %v644 = vpop.f32.mrb[0].mxu0
      %v645 = vadd.f32 0.0, %v644
      %v646 = vpop.f32.mrb[0].mxu0
      %647 = vmatprep.mubr.f32.mxu0 0.0
      %648 = vmatmul.mubr.f32.gmra.mrb[0].mxu0 %v440
      %v649 = vpop.f32.mrb[0].mxu0
      %v650 = vadd.f32 0.0, %v649
      %v651 = vpop.f32.mrb[0].mxu0
      %652 = vmatprep.mubr.f32.mxu0 0.0
      %653 = vmatmul.mubr.f32.gmra.mrb[0].mxu0 %v443
      %v654 = vpop.f32.mrb[0].mxu0
      %v655 = vadd.f32 0.0, %v654
      %v656 = vpop.f32.mrb[0].mxu0
      %657 = vmatprep.mubr.f32.mxu0 0.0
      %658 = vmatmul.mubr.f32.gmra.mrb[0].mxu0 %v446
      %v659 = vpop.f32.mrb[0].mxu0
      %v660 = vadd.f32 0.0, %v659
      %v661 = vpop.f32.mrb[0].mxu0
      %662 = vmatprep.mubr.f32.mxu0 0.0
      %663 = vmatmul.mubr.f32.gmra.mrb[0].mxu0 %v449
      %v664 = vpop.f32.mrb[0].mxu0
      %v665 = vadd.f32 0.0, %v664
      %v666 = vpop.f32.mrb[0].mxu0
      %667 = vmatprep.mubr.f32.mxu0 0.0
      %668 = vmatmul.mubr.f32.gmra.mrb[0].mxu0 %v452
      %v669 = vpop.f32.mrb[0].mxu0
      %v670 = vadd.f32 0.0, %v669
      %v671 = vpop.f32.mrb[0].mxu0
      %672 = vmatprep.mubr.f32.mxu0 0.0
      %673 = vmatmul.mubr.f32.gmra.mrb[0].mxu0 %v455
      %v674 = vpop.f32.mrb[0].mxu0
      %v675 = vadd.f32 0.0, %v674
      %v676 = vpop.f32.mrb[0].mxu0
      %677 = vdwg.mxu0
      %678 = vst.msk [vmem:[%s280] sm:$0xff] %vm562, %v640
      %679 = vst.msk [vmem:[%s280 + $0x8] sm:$0xff] %vm562, %v645
      %680 = vst.msk [vmem:[%s280 + $0x10] sm:$0xff] %vm562, %v650
      %681 = vst.msk [vmem:[%s280 + $0x18] sm:$0xff] %vm562, %v655
      %682 = vst.msk [vmem:[%s280 + $0x20] sm:$0xff] %vm562, %v660
      %683 = vst.msk [vmem:[%s280 + $0x28] sm:$0xff] %vm562, %v665
      %684 = vst.msk [vmem:[%s280 + $0x30] sm:$0xff] %vm562, %v670
      %685 = vst.msk [vmem:[%s280 + $0x38] sm:$0xff] %vm562, %v675
      %s686 = smul.u32 8, %s18
      %p687 = scmp.lt.s32.totalorder %s686, 15
      %s688 = scalar_select %p687, %s686, 15
      %s689 = smul.addr %s688, 4
      %s690 = scalar_lea.vmem %s4, %s689
      %s691 = smul.u32 8, %s18
      %p692 = scmp.lt.s32.totalorder %s691, 15
      %s693 = scalar_select %p692, %s691, 15
      %s694 = smul.addr %s693, 8
      %s695 = scalar_lea.vmem %s5, %s694
      %s696 = smul.u32 8, %s18
      %p697 = scmp.lt.s32.totalorder %s696, 15
      %s698 = scalar_select %p697, %s696, 15
      %s699 = smul.addr %s698, 8
      %s700 = scalar_lea.vmem %s6, %s699
      // Predicated region
      $region37: #{tpu_custom_call.1} parent=35 // pred_check
        %p701 = pneg %p125
      $region38: #{tpu_custom_call.1} parent=35 // pred_check_branch
        %703 = sbr.rel (%p701) target = $region40
      $region39: #{tpu_custom_call.1} parent=35 // pred_region
        %s704 = smul.u32 8, %s18
      $region40: #{tpu_custom_call.1} parent=35 // pred_fallthru
        _
      // Predicated region
      $region41: #{tpu_custom_call.1} parent=35 // pred_check
        %p705 = pneg %p151
      $region42: #{tpu_custom_call.1} parent=35 // pred_check_branch
        %707 = sbr.rel (%p705) target = $region44
      $region43: #{tpu_custom_call.1} parent=35 // pred_region
        %s708 = smul.u32 8, %s18
      $region44: #{tpu_custom_call.1} parent=35 // pred_fallthru
        _
      // Predicated region
      $region45: #{tpu_custom_call.1} parent=35 // pred_check
        %p709 = pneg %p177
      $region46: #{tpu_custom_call.1} parent=35 // pred_check_branch
        %711 = sbr.rel (%p709) target = $region48
      $region47: #{tpu_custom_call.1} parent=35 // pred_region
        %s712 = smul.u32 8, %s18
      $region48: #{tpu_custom_call.1} parent=35 // pred_fallthru
        _
    $region36: #{tpu_custom_call.1} parent=5 // pred_fallthru
      _
    %p713 = scmp.le.s32.totalorder 2, %s13
    // Predicated region
    $region49: #{tpu_custom_call.1} parent=5 // pred_check
      %p714 = pneg %p713
    $region50: #{tpu_custom_call.1} parent=5 // pred_check_branch
      %716 = sbr.rel (%p714) target = $region52
    $region51: #{tpu_custom_call.1} parent=5 // pred_region
      %s717 = ssub.s32 %s13, 2
      // Predicated region
      $region53: #{tpu_custom_call.1} parent=51 // pred_check
        %p718 = pneg %p131
      $region54: #{tpu_custom_call.1} parent=51 // pred_check_branch
        %720 = sbr.rel (%p718) target = $region56
      $region55: #{tpu_custom_call.1} parent=51 // pred_region
        %s721 = smul.u32 8, %s19
        %p722 = scmp.lt.s32.totalorder %s721, 15
        %s723 = scalar_select %p722, %s721, 15
        %s724 = smul.addr %s723, 4
        %s725 = scalar_lea.vmem %s4, %s724
      $region56: #{tpu_custom_call.1} parent=51 // pred_fallthru
        _
      // Predicated region
      $region57: #{tpu_custom_call.1} parent=51 // pred_check
        %p726 = pneg %p157
      $region58: #{tpu_custom_call.1} parent=51 // pred_check_branch
        %728 = sbr.rel (%p726) target = $region60
      $region59: #{tpu_custom_call.1} parent=51 // pred_region
        %s729 = smul.u32 8, %s19
        %p730 = scmp.lt.s32.totalorder %s729, 15
        %s731 = scalar_select %p730, %s729, 15
        %s732 = smul.addr %s731, 8
        %s733 = scalar_lea.vmem %s5, %s732
      $region60: #{tpu_custom_call.1} parent=51 // pred_fallthru
        _
      // Predicated region
      $region61: #{tpu_custom_call.1} parent=51 // pred_check
        %p734 = pneg %p183
      $region62: #{tpu_custom_call.1} parent=51 // pred_check_branch
        %736 = sbr.rel (%p734) target = $region64
      $region63: #{tpu_custom_call.1} parent=51 // pred_region
        %s737 = smul.u32 8, %s19
        %p738 = scmp.lt.s32.totalorder %s737, 15
        %s739 = scalar_select %p738, %s737, 15
        %s740 = smul.addr %s739, 8
        %s741 = scalar_lea.vmem %s6, %s740
      $region64: #{tpu_custom_call.1} parent=51 // pred_fallthru
        _
    $region52: #{tpu_custom_call.1} parent=5 // pred_fallthru
      _
  $region6: #{tpu_custom_call.1} parent=0 // loop_footer
    %s17 = sadd.s32 1, %s13
  $region7: #{tpu_custom_call.1} parent=0 // loop_footer_branch
    %12 = sbr.rel target = $region3
  $region8: #{tpu_custom_call.1} parent=0 // loop_exit
    _

</llo_original>
